<compile_context>
chip_gen: v6e
topology: v6e:2x2x1
jax: 0.10.0
libtpu: 0.0.40
codegen_flags: <defaults>
</compile_context>

<pallas_src>
import math
import functools

import jax
import jax.numpy as jnp
from jax import lax
from jax.experimental import pallas as pl
from jax.experimental.pallas import tpu as pltpu


# ---------------------------------------------------------------------------
# pe table construction (mirrors the PyTorch module __init__)
# ---------------------------------------------------------------------------
def make_positional_encoding(max_len, d_model, dtype=jnp.float32):
    """Deterministic pe buffer, identical to the PyTorch __init__: (L, 1, D)."""
    position = jnp.arange(max_len, dtype=jnp.float32)[:, None]            # (L,1)
    div_term = jnp.exp(
        jnp.arange(0, d_model, 2, dtype=jnp.float32)
        * (-math.log(10000.0) / d_model))                                 # (D/2,)
    angles = position * div_term                                          # (L,D/2)
    pe = jnp.zeros((max_len, d_model), dtype=jnp.float32)
    pe = pe.at[:, 0::2].set(jnp.sin(angles))
    pe = pe.at[:, 1::2].set(jnp.cos(angles))
    return pe[:, None, :].astype(dtype)                                   # (L,1,D)


# ---------------------------------------------------------------------------
# kernel
# ---------------------------------------------------------------------------
def _pe_dropout_kernel(seed_ref, x_ref, pe_ref, o_ref, *, batch,
                       apply_dropout, keep_threshold, drop_scale,
                       compute_dtype):
    # x_ref: (tile_s, B*D)   pe_ref: (tile_s, D)   o_ref: (tile_s, B*D)
    x = x_ref[...].astype(compute_dtype)
    pe_blk = pe_ref[...].astype(compute_dtype)
    if batch > 1:
        # Broadcast pe across batch along the lane axis (cheap XLU copies;
        # avoids reading a B-times-larger pre-tiled pe from HBM).
        pe_blk = jnp.concatenate([pe_blk] * batch, axis=-1)
    y = x + pe_blk

    if apply_dropout:
        tile_rows, lanes = x_ref.shape
        row = lax.broadcasted_iota(jnp.int32, (tile_rows, lanes), 0)
        col = lax.broadcasted_iota(jnp.int32, (tile_rows, lanes), 1)
        global_row = row + pl.program_id(0) * tile_rows
        gid = (global_row.astype(jnp.uint32) * jnp.uint32(lanes)
               + col.astype(jnp.uint32))
        # Stateless counter-based hash (murmur3 finalizer flavour).  Pure
        # integer VALU work that hides under the HBM roofline; the eval path
        # skips it entirely (static `apply_dropout` flag).
        h = gid ^ seed_ref[0].astype(jnp.uint32)
        h = h * jnp.uint32(0x9E3779B1)
        h = h ^ (h >> 15)
        h = h * jnp.uint32(0x85EBCA6B)
        h = h ^ (h >> 13)
        h = h * jnp.uint32(0xC2B2AE35)
        h = h ^ (h >> 16)
        # Drop with probability p  <=>  keep iff h >= p * 2^32 (pure uint cmp).
        keep = h >= jnp.uint32(keep_threshold)
        y = jnp.where(keep, y * jnp.asarray(drop_scale, dtype=compute_dtype),
                      jnp.zeros_like(y))

    o_ref[...] = y.astype(o_ref.dtype)


# ---------------------------------------------------------------------------
# sizing helpers
# ---------------------------------------------------------------------------
def _vmem_capacity_bytes():
    # Fall back to the smallest per-TensorCore VMEM of the supported
    # generations (v7x: 64 MiB) so a conservative budget works everywhere.
    try:
        return int(getattr(pltpu.get_tpu_info(), "vmem_capacity_bytes"))
    except Exception:
        return 64 * 1024 * 1024


def _choose_tile_s(S, row_bytes, tile_bytes_target):
    """Largest multiple-of-8 seq tile with x-slab <= target, preferring exact
    divisors of S (no ragged last block)."""
    if S <= 8:
        return S
    max_rows = max(8, min(S, tile_bytes_target // max(row_bytes, 1)))
    max_rows = max(8, (max_rows // 8) * 8)
    for t in range(max_rows, 7, -8):
        if S % t == 0:
            return t
    return max_rows   # ragged tail; Pallas masks the final partial block


# ---------------------------------------------------------------------------
# wrapper
# ---------------------------------------------------------------------------
def positional_encoding_forward(x, pe, *, dropout_p=0.1, training=False,
                                seed=0, tile_s=None, compute_dtype=None):
    """x: (S, B, D), pe: (max_len, 1, D) or (max_len, D) -> (S, B, D)."""
    S, B, D = x.shape
    max_len = pe.shape[0]
    assert max_len >= S and pe.shape[-1] == D

    pe2d = pe.reshape(max_len, D)[:S]           # (S, D)   small, sublane-dense
    x2d = x.reshape(S, B * D)                   # free row-major reshape

    if compute_dtype is None:
        compute_dtype = x.dtype                 # bf16 native on v6e/v7x

    itemsize = jnp.dtype(x.dtype).itemsize
    row_bytes = B * D * itemsize
    vmem_limit = int(min(_vmem_capacity_bytes() // 2, 64 * 1024 * 1024))
    if tile_s is None:
        # x-tile + double-buffering for x, pe, out must fit comfortably.
        tile_target = max(1 << 20, min(4 << 20, vmem_limit // 12))
        tile_s = _choose_tile_s(S, row_bytes, tile_target)
    grid = (pl.cdiv(S, tile_s),)

    p = float(dropout_p)
    apply_dropout = bool(training and p > 0.0)
    keep_threshold = min(int(p * (1 << 32)), (1 << 32) - 1)
    drop_scale = 1.0 / (1.0 - p) if p < 1.0 else 0.0

    kernel = functools.partial(
        _pe_dropout_kernel, batch=B, apply_dropout=apply_dropout,
        keep_threshold=keep_threshold, drop_scale=drop_scale,
        compute_dtype=compute_dtype)

    seed_arr = jnp.asarray([seed], dtype=jnp.int32)

    out2d = pl.pallas_call(
        kernel,
        out_shape=jax.ShapeDtypeStruct((S, B * D), x.dtype),
        grid_spec=pltpu.PrefetchScalarGridSpec(
            num_scalar_prefetch=1,                      # seed lands in SMEM
            grid=grid,
            in_specs=[
                pl.BlockSpec((tile_s, B * D), lambda i, seed_ref: (i, 0)),
                pl.BlockSpec((tile_s, D), lambda i, seed_ref: (i, 0)),
            ],
            out_specs=pl.BlockSpec((tile_s, B * D), lambda i, seed_ref: (i, 0)),
        ),
        compiler_params=pltpu.CompilerParams(
            dimension_semantics=("parallel",),
            vmem_limit_bytes=vmem_limit),
    )(seed_arr, x2d, pe2d)

    return out2d.reshape(S, B, D)


# ---------------------------------------------------------------------------
# demo / self-check
# ---------------------------------------------------------------------------
if __name__ == "__main__":
    S, B, D = 8, 2, 32
    MAX_LEN = 100
    DROPOUT_P = 0.1

    key = jax.random.PRNGKey(0)
    x = jax.random.normal(key, (S, B, D), dtype=jnp.float32)
    pe = make_positional_encoding(MAX_LEN, D, dtype=jnp.float32)

    # Eval mode (dropout is identity): compare against the pure-JAX reference.
    out_eval = jax.block_until_ready(
        positional_encoding_forward(x, pe, dropout_p=DROPOUT_P, training=False))
    ref = x + pe[:S]
    assert out_eval.shape == (S, B, D)
    assert jnp.allclose(out_eval, ref, atol=1e-5, rtol=1e-5), "eval mismatch vs reference"

    # Training mode (in-kernel hash dropout): every element must be either 0
    # or the reference value scaled by 1/(1-p), and the drop rate must be sane.
    out_train = jax.block_until_ready(
        positional_encoding_forward(x, pe, dropout_p=DROPOUT_P, training=True,
                                    seed=1234))
    assert out_train.shape == (S, B, D)
    scaled = ref / (1.0 - DROPOUT_P)
    ok = jnp.isclose(out_train, scaled, atol=1e-5, rtol=1e-5) | (out_train == 0)
    assert bool(jnp.all(ok)), "training output not in {0, ref/(1-p)}"
    drop_frac = float(jnp.mean((out_train == 0).astype(jnp.float32)))
    assert 0.0 < drop_frac < 0.5, f"suspicious drop fraction {drop_frac}"
    # TODO(synk): torch.nn.Dropout uses torch's own RNG stream; the mask here
    # matches it only distributionally (Bernoulli(p), inverted scaling), not
    # bit-exactly.

    print("KERNEL_OK")
</pallas_src>

<mosaic_0001>
module attributes {stable_mosaic.version = 11 : i64} {
  func.func @_pe_dropout_kernel(%arg0: i32, %arg1: memref<1xi32, #tpu.memory_space<smem>>, %arg2: memref<8x64xf32, #tpu.memory_space<vmem>>, %arg3: memref<8x32xf32, #tpu.memory_space<vmem>>, %arg4: memref<8x64xf32, #tpu.memory_space<vmem>>) attributes {dimension_semantics = [#tpu.dimension_semantics<parallel>], iteration_bounds = array<i64: 1>, scalar_prefetch = 1 : i64, scratch_operands = 0 : i64, tpu.core_type = #tpu.core_type<tc>, window_params = [{transform_indices = @transform_0, window_bounds = array<i64: 8, 64>}, {transform_indices = @transform_1, window_bounds = array<i64: 8, 32>}, {transform_indices = @transform_2, window_bounds = array<i64: 8, 64>}]} {
    %c0 = arith.constant 0 : index
    %c0_0 = arith.constant 0 : index
    %0 = vector.load %arg2[%c0, %c0_0] : memref<8x64xf32, #tpu.memory_space<vmem>>, vector<8x64xf32>
    %c0_1 = arith.constant 0 : index
    %c0_2 = arith.constant 0 : index
    %1 = vector.load %arg3[%c0_1, %c0_2] : memref<8x32xf32, #tpu.memory_space<vmem>>, vector<8x32xf32>
    %2 = tpu.concatenate %1, %1 in 1 : vector<8x32xf32>, vector<8x32xf32> -> vector<8x64xf32>
    %3 = arith.addf %0, %2 : vector<8x64xf32>
    %c0_3 = arith.constant 0 : index
    %c0_4 = arith.constant 0 : index
    %4 = vector.load %arg4[%c0_3, %c0_4] : memref<8x64xf32, #tpu.memory_space<vmem>>, vector<8x64xf32>
    tpu.vector_store %arg4[%c0_3, %c0_4], %3 {strides = array<i32>} : memref<8x64xf32, #tpu.memory_space<vmem>>, vector<8x64xf32>,
    return
  }
  func.func @transform_0(%arg0: i32, %arg1: memref<1xi32, #tpu.memory_space<smem>>) -> (i32, i32) {
    %c0_i32 = arith.constant 0 : i32
    %c0_i32_0 = arith.constant 0 : i32
    return %arg0, %c0_i32 : i32, i32
  }
  func.func @transform_1(%arg0: i32, %arg1: memref<1xi32, #tpu.memory_space<smem>>) -> (i32, i32) {
    %c0_i32 = arith.constant 0 : i32
    %c0_i32_0 = arith.constant 0 : i32
    return %arg0, %c0_i32 : i32, i32
  }
  func.func @transform_2(%arg0: i32, %arg1: memref<1xi32, #tpu.memory_space<smem>>) -> (i32, i32) {
    %c0_i32 = arith.constant 0 : i32
    %c0_i32_0 = arith.constant 0 : i32
    return %arg0, %c0_i32 : i32, i32
  }
}

</mosaic_0001>

<llo_original>
// kernel: tpu_custom_call.1
$region0: #{tpu_custom_call.1}
  #allocation0 [shape = 'u32[]', space=smem, size = 0x4, offset = 0x4, fixed_abs, tag = 'smem constant byte address 0x4 - core index']
  #allocation1 [shape = 'u32[144,128]{1,0:T(1,128)}', space=vmem, size = 0x12000, scoped, tag = 'internal scratch']
  #allocation2 [shape = 's32[1]{0}', space=sflag, size = 0x4, scoped, tag = 'scoped memory for tpu_custom_call.1']
  #allocation3 [shape = 's32[1]{0:T(128)S(6)}', space=smem, size = 0x200, scoped, tag = 'prefetched SMEM operand 0']
  %s0 = inlined_call_operand.<no memory space> [shape: s32[1], index: 0, kind: input, shape index: {}]
  %s1 = inlined_call_operand.hbm [shape: f32[8,64], index: 1, kind: input, shape index: {}]
  %s2 = inlined_call_operand.hbm [shape: f32[8,32], index: 2, kind: input, shape index: {}]
  %s3 = inlined_call_operand.hbm [shape: f32[8,64], index: 3, kind: output, shape index: {}]
  %s4 = sld [smem:[#allocation0]]
  $region26: #{tpu_custom_call.1} parent=0
    _
  %s6 = ssub.s32 1, %s4
  %s7 = scalar_select 0, %s6, %s4
  %8 = sst [smem:[#allocation3]] %s0
  $region1: #{tpu_custom_call.1} parent=0
    #allocation4 [shape = 'u8[4096]{0}', space=vmem, size = 0x1000, scoped, tag = 'input window, operand 1, single buffered']
    #allocation5 [shape = 's32[1]{0}', space=sflag, size = 0x4, scoped, tag = 'scoped memory for tpu_custom_call.1']
    #allocation6 [shape = 's32[1]{0}', space=sflag, size = 0x4, scoped, tag = 'scoped memory for tpu_custom_call.1']
    #allocation7 [shape = 'u8[4096]{0}', space=vmem, size = 0x1000, scoped, tag = 'input window, operand 2, single buffered']
    #allocation8 [shape = 's32[1]{0}', space=sflag, size = 0x4, scoped, tag = 'scoped memory for tpu_custom_call.1']
    #allocation9 [shape = 'u8[4096]{0}', space=vmem, size = 0x1000, scoped, tag = 'output window, operand 0, single buffered']
    %9 = vsyncpa [#allocation5], 0
    %10 = vsyncpa [#allocation8], 0
    %11 = vsyncpa [#allocation6], 0
    // Predicated region
    $region2: #{tpu_custom_call.1} parent=1 // pred_check
      _
    $region3: #{tpu_custom_call.1} parent=1 // pred_check_branch
      %13 = sbr.rel (0) target = $region5
    $region4: #{tpu_custom_call.1} parent=1 // pred_region
      %s15 = ssub.s32 128, 128
      %16 = vsyncadd [#allocation5], %s15
      %s18 = sshll.u32 [#allocation4], 4
      %s19 = int_to_ptr.vmem [resolvable:$true] %s18
      %21 = dma.hbm_to_vmem [thread:$0]  %s1, 128, %s19, [#allocation5]
    $region5: #{tpu_custom_call.1} parent=1 // pred_fallthru
      _
    // Predicated region
    $region6: #{tpu_custom_call.1} parent=1 // pred_check
      _
    $region7: #{tpu_custom_call.1} parent=1 // pred_check_branch
      %23 = sbr.rel (0) target = $region9
    $region8: #{tpu_custom_call.1} parent=1 // pred_region
      %s25 = ssub.s32 128, 128
      %26 = vsyncadd [#allocation8], %s25
      %s28 = sshll.u32 [#allocation7], 4
      %s29 = int_to_ptr.vmem [resolvable:$true] %s28
      %31 = dma.hbm_to_vmem [thread:$0]  %s2, 128, %s29, [#allocation8]
    $region9: #{tpu_custom_call.1} parent=1 // pred_fallthru
      _
    // Predicated region
    $region10: #{tpu_custom_call.1} parent=1 // pred_check
      _
    $region11: #{tpu_custom_call.1} parent=1 // pred_check_branch
      %33 = sbr.rel (0) target = $region13
    $region12: #{tpu_custom_call.1} parent=1 // pred_region
      %34 = dma.done [#allocation5], 128
    $region13: #{tpu_custom_call.1} parent=1 // pred_fallthru
      _
    // Predicated region
    $region14: #{tpu_custom_call.1} parent=1 // pred_check
      _
    $region15: #{tpu_custom_call.1} parent=1 // pred_check_branch
      %36 = sbr.rel (0) target = $region17
    $region16: #{tpu_custom_call.1} parent=1 // pred_region
      %37 = dma.done [#allocation8], 128
    $region17: #{tpu_custom_call.1} parent=1 // pred_fallthru
      _
    %v38 = vld [vmem:[#allocation4] sm:$0xff]
    %v39 = vld [vmem:[#allocation7] sm:$0xff]
    %41 = vrot.lane.b32.xlu0 %v39, 32
    %v42 = vpop.permute.xlu0 %41
    %vm44 = vcmask 261120
    %v45 = vsel %vm44, %v39, %v42
    %v46 = vadd.f32 %v38, %v45
    %vm47 = vcmask 523264
    %48 = vst.msk [vmem:[#allocation9] sm:$0xff] %vm47, %v46
    // Predicated region
    $region18: #{tpu_custom_call.1} parent=1 // pred_check
      _
    $region19: #{tpu_custom_call.1} parent=1 // pred_check_branch
      %50 = sbr.rel (0) target = $region21
    $region20: #{tpu_custom_call.1} parent=1 // pred_region
      %s52 = ssub.s32 128, 128
      %53 = vsyncadd [#allocation6], %s52
      %s55 = sshll.u32 [#allocation9], 4
      %s56 = int_to_ptr.vmem [resolvable:$true] %s55
      %58 = dma.vmem_to_hbm [thread:$0]  %s56, 128, %s3, [#allocation6]
    $region21: #{tpu_custom_call.1} parent=1 // pred_fallthru
      _
    // Predicated region
    $region22: #{tpu_custom_call.1} parent=1 // pred_check
      _
    $region23: #{tpu_custom_call.1} parent=1 // pred_check_branch
      %60 = sbr.rel (0) target = $region25
    $region24: #{tpu_custom_call.1} parent=1 // pred_region
      %61 = dma.done [#allocation6], 128
    $region25: #{tpu_custom_call.1} parent=1 // pred_fallthru
      _
    %62 = vsyncpa [#allocation5], 1
    %63 = vsyncpa [#allocation8], 1
    %64 = vsyncpa [#allocation6], 1

</llo_original>
